<compile_context>
chip_gen: v5e
topology: v5e:2x2
jax: 0.10.0
libtpu: 0.0.40
codegen_flags: <defaults>
</compile_context>

<pallas_src>
import functools

import jax
import jax.numpy as jnp
from jax.experimental import pallas as pl
from jax.experimental.pallas import tpu as pltpu

_LANE = 128


def _copy_kernel(x_ref, o_ref):
    # TODO(synk): reference forward() is `pass`; the replay buffers,
    # self-supervised training loops, optimizer/lr-scheduler state, and the
    # external backbone Net have no Pallas equivalent, so the kernel reproduces
    # the only tensor semantics present: a no-op (identity) on x.
    o_ref[...] = x_ref[...]


def _sublane_multiple(dtype) -> int:
    """Minimum second-to-last-dim multiple for a legal TPU tile of this dtype."""
    itemsize = jnp.dtype(dtype).itemsize
    return {4: 8, 2: 16, 1: 32}.get(itemsize, 8)


def _block_cap_bytes() -> int:
    """Per-block byte cap, derived from this chip's VMEM capacity."""
    try:
        vmem = int(pltpu.get_tpu_info().vmem_capacity_bytes)
    except Exception:  # pragma: no cover - conservative fallback
        vmem = 64 * 1024 * 1024
    # ~4 live blocks (in + out, double-buffered) must fit with large headroom:
    # 64 MiB VMEM (v7x)  -> 4 MiB blocks; 128 MiB (v5e/v6e) -> 8 MiB blocks.
    return int(min(8 * 1024 * 1024, max(2 * 1024 * 1024, vmem // 16)))


@functools.partial(jax.jit, static_argnames=())
def diverse_cont_forward(x):
    """Pallas equivalent of DiverseCont.forward: identity pass-through of x."""
    orig_shape = x.shape
    dtype = x.dtype
    size = x.size
    itemsize = jnp.dtype(dtype).itemsize
    sub = _sublane_multiple(dtype)

    # Short-circuit (perf review): forward() is a no-op.  If the tensor is not
    # an exact lane-dense multiple (would need pad + tail-slice copies) or is
    # tiny, just return x -- zero HBM traffic instead of 2-4x tensor bytes.
    if size == 0 or size % (_LANE * sub) != 0:
        return x

    rows = size // _LANE                      # multiple of `sub` by the gate above
    x2 = x.reshape(rows, _LANE)               # pure row-major reshape, no copy

    # Row tile: balanced so it (nearly) divides rows, multiple of the sublane
    # pack, and capped to a generation-aware per-block VMEM footprint.
    block_cap = _block_cap_bytes()
    max_tile_rows = max(sub, block_cap // (_LANE * itemsize))
    n_blocks = pl.cdiv(rows, max_tile_rows)
    tile_r = pl.cdiv(rows, n_blocks)
    tile_r = min(rows, ((tile_r + sub - 1) // sub) * sub)
    grid = (pl.cdiv(rows, tile_r),)

    block_bytes = tile_r * _LANE * itemsize
    vmem_limit = int(min(6 * block_bytes + (1 << 20), 48 * 1024 * 1024))

    out2 = pl.pallas_call(
        _copy_kernel,
        out_shape=jax.ShapeDtypeStruct(x2.shape, x2.dtype),
        grid=grid,
        in_specs=[pl.BlockSpec((tile_r, _LANE), lambda i: (i, 0))],
        out_specs=pl.BlockSpec((tile_r, _LANE), lambda i: (i, 0)),
        input_output_aliases={0: 0},
        cost_estimate=pl.CostEstimate(
            flops=0, transcendentals=0, bytes_accessed=2 * size * itemsize),
        compiler_params=pltpu.CompilerParams(
            # TODO(synk): plain "parallel" may not shard across both v7x TCs;
            # verify in a trace and switch to CORE_PARALLEL / core_map if not.
            dimension_semantics=("parallel",),
            vmem_limit_bytes=vmem_limit),
    )(x2)

    return out2.reshape(orig_shape)


if __name__ == "__main__":
    key = jax.random.PRNGKey(0)
    # Small NCHW input consistent with an image-replay continual-learning model.
    # 2*4*16*16 = 2048 elements -> exact multiple of 8*128, so the Pallas
    # kernel path (not the short-circuit) is exercised.
    x = jax.random.normal(key, (2, 4, 16, 16), dtype=jnp.float32)

    y = diverse_cont_forward(x)
    y = jax.block_until_ready(y)

    # Sanity: forward is a no-op on x -> output must equal input exactly.
    assert y.shape == x.shape and y.dtype == x.dtype
    assert bool(jnp.all(y == x))

    # Also exercise the short-circuit path (ragged size -> returns x directly).
    x_small = jax.random.normal(key, (1, 3, 5, 7), dtype=jnp.float32)
    y_small = jax.block_until_ready(diverse_cont_forward(x_small))
    assert bool(jnp.all(y_small == x_small))

    print("KERNEL_OK")
</pallas_src>

<mosaic_0001>
module attributes {stable_mosaic.version = 11 : i64} {
  func.func @_copy_kernel(%arg0: i32, %arg1: memref<16x128xf32, #tpu.memory_space<vmem>>, %arg2: memref<16x128xf32, #tpu.memory_space<vmem>>) attributes {dimension_semantics = [#tpu.dimension_semantics<parallel>], iteration_bounds = array<i64: 1>, scalar_prefetch = 0 : i64, scratch_operands = 0 : i64, tpu.core_type = #tpu.core_type<tc>, window_params = [{transform_indices = @transform_0, window_bounds = array<i64: 16, 128>}, {transform_indices = @transform_1, window_bounds = array<i64: 16, 128>}]} {
    %c0 = arith.constant 0 : index
    %c0_0 = arith.constant 0 : index
    %0 = vector.load %arg1[%c0, %c0_0] : memref<16x128xf32, #tpu.memory_space<vmem>>, vector<16x128xf32>
    %c0_1 = arith.constant 0 : index
    %c0_2 = arith.constant 0 : index
    %1 = vector.load %arg2[%c0_1, %c0_2] : memref<16x128xf32, #tpu.memory_space<vmem>>, vector<16x128xf32>
    tpu.vector_store %arg2[%c0_1, %c0_2], %0 {strides = array<i32>} : memref<16x128xf32, #tpu.memory_space<vmem>>, vector<16x128xf32>,
    return
  }
  func.func @transform_0(%arg0: i32) -> (i32, i32) {
    %c0_i32 = arith.constant 0 : i32
    %c0_i32_0 = arith.constant 0 : i32
    return %arg0, %c0_i32 : i32, i32
  }
  func.func @transform_1(%arg0: i32) -> (i32, i32) {
    %c0_i32 = arith.constant 0 : i32
    %c0_i32_0 = arith.constant 0 : i32
    return %arg0, %c0_i32 : i32, i32
  }
}

</mosaic_0001>

<llo_original>
// kernel: diverse_cont_forward.1
$region0: #{diverse_cont_forward.1}
  #allocation0 [shape = 'u32[]', space=smem, size = 0x4, offset = 0x4, fixed_abs, tag = 'smem constant byte address 0x4 - core index']
  #allocation1 [shape = 'u32[72,128]{1,0:T(1,128)}', space=vmem, size = 0x9000, scoped, tag = 'internal scratch']
  %s0 = inlined_call_operand.vmem [shape: f32[16,128], index: 0, kind: input, shape index: {}, may-alias: {0,1}]
  %s1 = inlined_call_operand.vmem [shape: f32[16,128], index: 1, kind: output, shape index: {}, may-alias: {0,1}]
  %s2 = sld [smem:[#allocation0]]
  $region14: #{diverse_cont_forward.1} parent=0
    _
  %s4 = ssub.s32 1, %s2
  %s5 = scalar_select 0, %s4, %s2
  // Predicated region
  $region2: #{diverse_cont_forward.1} parent=0 // pred_check
    _
  $region3: #{diverse_cont_forward.1} parent=0 // pred_check_branch
    %7 = sbr.rel (0) target = $region5
  $region4: #{diverse_cont_forward.1} parent=0 // pred_region
    _
  $region5: #{diverse_cont_forward.1} parent=0 // pred_fallthru
    _
  %v8 = vld [vmem:[%s0] sm:$0xff]
  %v9 = vld [vmem:[%s0 + $0x8] sm:$0xff]
  %10 = vst [vmem:[%s1] sm:$0xff] %v8
  %11 = vst [vmem:[%s1 + $0x8] sm:$0xff] %v9
  // Predicated region
  $region6: #{diverse_cont_forward.1} parent=0 // pred_check
    _
  $region7: #{diverse_cont_forward.1} parent=0 // pred_check_branch
    %13 = sbr.rel (0) target = $region9
  $region8: #{diverse_cont_forward.1} parent=0 // pred_region
    _
  $region9: #{diverse_cont_forward.1} parent=0 // pred_fallthru
    _
  // Predicated region
  $region10: #{diverse_cont_forward.1} parent=0 // pred_check
    _
  $region11: #{diverse_cont_forward.1} parent=0 // pred_check_branch
    %15 = sbr.rel (0) target = $region13
  $region12: #{diverse_cont_forward.1} parent=0 // pred_region
    _
  $region13: #{diverse_cont_forward.1} parent=0 // pred_fallthru
    _

</llo_original>
